<compile_context>
chip_gen: v5e
topology: v5e:2x2
jax: 0.10.0
libtpu: 0.0.40
codegen_flags: <defaults>
</compile_context>

<pallas_src>
import functools

import jax
import jax.numpy as jnp
from jax import lax
from jax.experimental import pallas as pl
from jax.experimental.pallas import tpu as pltpu


def _round_up(x, m):
    return (x + m - 1) // m * m


# ---------------------------------------------------------------------------
# Kernel 1: H1 = relu(Ahat @ X @ W1 + b1), tiled over node rows ("parallel").
# ---------------------------------------------------------------------------
def gcn_layer1_kernel(a_ref, x_ref, w1_ref, b1_ref, h1_ref):
    # (TM, Np) @ (Np, F_in) -> (TM, F_in); bf16 operands, f32 accumulate (MXU).
    agg = jnp.dot(a_ref[...], x_ref[...], preferred_element_type=jnp.float32)
    h = jnp.dot(agg.astype(jnp.bfloat16), w1_ref[...],
                preferred_element_type=jnp.float32)
    h = jnp.maximum(h + b1_ref[...], 0.0)          # bias add once per tile, f32
    h1_ref[...] = h.astype(h1_ref.dtype)           # lane-dense (TM, 128) store


# ---------------------------------------------------------------------------
# Kernel 2: per-tile relu(Ahat @ H1 @ W2 + b2), row-sum accumulated across the
# (reduction) grid axis; final step divides by N  == dgl.mean_nodes (1 graph).
# ---------------------------------------------------------------------------
def gcn_layer2_readout_kernel(a_ref, h1_ref, w2_ref, b2_ref, o_ref, acc_ref,
                              *, n_valid, tile_m):
    i = pl.program_id(0)

    @pl.when(i == 0)
    def _init():
        acc_ref[...] = jnp.zeros_like(acc_ref)

    agg = jnp.dot(a_ref[...], h1_ref[...], preferred_element_type=jnp.float32)
    h2 = jnp.dot(agg.astype(jnp.bfloat16), w2_ref[...],
                 preferred_element_type=jnp.float32)
    h2 = jnp.maximum(h2 + b2_ref[...], 0.0)

    # Mask node-padding rows so they do not pollute the graph readout.
    row_ids = i * tile_m + lax.broadcasted_iota(jnp.int32, h2.shape, 0)
    h2 = jnp.where(row_ids < n_valid, h2, 0.0)

    acc_ref[...] += jnp.sum(h2, axis=0, keepdims=True)

    @pl.when(i == pl.num_programs(0) - 1)
    def _finalize():
        o_ref[...] = (acc_ref[...] * (1.0 / n_valid)).astype(o_ref.dtype)


def gcn_forward(a_norm, x, w1, b1, w2, b2, *, tile_m=128,
                vmem_limit_bytes=32 * 1024 * 1024):
    """GCN forward.

    a_norm : (N, N)   normalized adjacency D^-1/2 A D^-1/2   (float32)
    x      : (N, F_in) node features                         (float32)
    w1     : (F_in, H), b1 : (H,)     GraphConv-1 params
    w2     : (H, C),    b2 : (C,)     GraphConv-2 params
    returns: (1, C)   mean-over-nodes graph embedding (float32)
    """
    n, f_in = x.shape
    h_feats = w1.shape[1]
    c = w2.shape[1]

    # ---- layout: pad node dim to tile_m, hidden dim to lane width ----------
    n_pad = _round_up(n, tile_m)
    hp = _round_up(h_feats, 128)

    a_bf = jnp.zeros((n_pad, n_pad), jnp.bfloat16).at[:n, :n].set(
        a_norm.astype(jnp.bfloat16))
    x_bf = jnp.zeros((n_pad, f_in), jnp.bfloat16).at[:n, :].set(
        x.astype(jnp.bfloat16))
    w1_bf = jnp.zeros((f_in, hp), jnp.bfloat16).at[:, :h_feats].set(
        w1.astype(jnp.bfloat16))
    b1_p = jnp.zeros((1, hp), jnp.float32).at[:, :h_feats].set(
        b1.reshape(1, -1).astype(jnp.float32))
    w2_bf = jnp.zeros((hp, c), jnp.bfloat16).at[:h_feats, :].set(
        w2.astype(jnp.bfloat16))
    b2_p = b2.reshape(1, c).astype(jnp.float32)

    grid = (n_pad // tile_m,)

    # ---- layer 1: row-parallel, weights/X VMEM-resident ---------------------
    h1 = pl.pallas_call(
        gcn_layer1_kernel,
        out_shape=jax.ShapeDtypeStruct((n_pad, hp), jnp.bfloat16),
        grid=grid,
        in_specs=[
            pl.BlockSpec((tile_m, n_pad), lambda i: (i, 0)),   # Ahat row slab (streamed)
            pl.BlockSpec((n_pad, f_in), lambda i: (0, 0)),     # X       (resident)
            pl.BlockSpec((f_in, hp), lambda i: (0, 0)),        # W1      (resident)
            pl.BlockSpec((1, hp), lambda i: (0, 0)),           # b1      (resident)
        ],
        out_specs=pl.BlockSpec((tile_m, hp), lambda i: (i, 0)),
        compiler_params=pltpu.CompilerParams(
            dimension_semantics=("parallel",),
            vmem_limit_bytes=vmem_limit_bytes),
    )(a_bf, x_bf, w1_bf, b1_p)

    # ---- layer 2 + mean_nodes readout: reduction over row tiles -------------
    kernel2 = functools.partial(gcn_layer2_readout_kernel,
                                n_valid=n, tile_m=tile_m)
    out = pl.pallas_call(
        kernel2,
        out_shape=jax.ShapeDtypeStruct((1, c), jnp.float32),
        grid=grid,
        in_specs=[
            pl.BlockSpec((tile_m, n_pad), lambda i: (i, 0)),   # Ahat row slab (streamed)
            pl.BlockSpec((n_pad, hp), lambda i: (0, 0)),       # H1      (resident)
            pl.BlockSpec((hp, c), lambda i: (0, 0)),           # W2      (resident)
            pl.BlockSpec((1, c), lambda i: (0, 0)),            # b2      (resident)
        ],
        out_specs=pl.BlockSpec((1, c), lambda i: (0, 0)),       # accumulator output
        scratch_shapes=[pltpu.VMEM((1, c), jnp.float32)],
        compiler_params=pltpu.CompilerParams(
            dimension_semantics=("arbitrary",),                 # reduction axis
            vmem_limit_bytes=vmem_limit_bytes),
    )(a_bf, h1, w2_bf, b2_p)

    # TODO(synk): batched-graph readout (dgl.mean_nodes over multiple graphs)
    # would need a per-graph segment mean; single-graph readout implemented.
    return out


if __name__ == "__main__":
    # Small shapes consistent with the module: one graph, modest node count.
    N, in_feats, h_feats, out_feats = 350, 16, 32, 4

    key = jax.random.PRNGKey(0)
    k_g, k_x, k_w1, k_b1, k_w2, k_b2 = jax.random.split(key, 6)

    # Deterministic random undirected graph: ring (min degree 2, no 0-in-degree
    # nodes, as DGL GraphConv requires) plus sprinkled random edges, no self-loops.
    upper = jax.random.bernoulli(k_g, 0.05, (N, N)).astype(jnp.float32)
    adj = jnp.triu(upper, 1)
    adj = adj + adj.T
    idx = jnp.arange(N)
    adj = adj.at[idx, (idx + 1) % N].set(1.0)
    adj = adj.at[(idx + 1) % N, idx].set(1.0)
    adj = jnp.minimum(adj, 1.0)

    deg = jnp.sum(adj, axis=1)
    d_inv_sqrt = 1.0 / jnp.sqrt(deg)
    a_norm = adj * d_inv_sqrt[:, None] * d_inv_sqrt[None, :]

    x = jax.random.normal(k_x, (N, in_feats), dtype=jnp.float32)

    # Deterministic parameter init (Linear-like uniform ranges), stored (in, out).
    bound1 = 1.0 / (in_feats ** 0.5)
    w1 = jax.random.uniform(k_w1, (in_feats, h_feats), jnp.float32, -bound1, bound1)
    b1 = jax.random.uniform(k_b1, (h_feats,), jnp.float32, -bound1, bound1)
    bound2 = 1.0 / (h_feats ** 0.5)
    w2 = jax.random.uniform(k_w2, (h_feats, out_feats), jnp.float32, -bound2, bound2)
    b2 = jax.random.uniform(k_b2, (out_feats,), jnp.float32, -bound2, bound2)

    out = gcn_forward(a_norm, x, w1, b1, w2, b2, tile_m=128)
    out = jax.block_until_ready(out)

    # Pure-JAX reference mirroring the kernel math (bf16 operands, f32 accum).
    a_bf = a_norm.astype(jnp.bfloat16)
    x_bf = x.astype(jnp.bfloat16)
    w1_bf = w1.astype(jnp.bfloat16)
    w2_bf = w2.astype(jnp.bfloat16)
    agg1 = jnp.dot(a_bf, x_bf, preferred_element_type=jnp.float32)
    h1_ref = jnp.maximum(
        jnp.dot(agg1.astype(jnp.bfloat16), w1_bf,
                preferred_element_type=jnp.float32) + b1[None, :], 0.0)
    agg2 = jnp.dot(a_bf, h1_ref.astype(jnp.bfloat16),
                   preferred_element_type=jnp.float32)
    h2_ref = jnp.maximum(
        jnp.dot(agg2.astype(jnp.bfloat16), w2_bf,
                preferred_element_type=jnp.float32) + b2[None, :], 0.0)
    ref = jnp.mean(h2_ref, axis=0, keepdims=True)

    assert out.shape == (1, out_feats)
    assert jnp.allclose(out, ref, atol=1e-2, rtol=1e-2), (out, ref)

    print("KERNEL_OK")
</pallas_src>

<mosaic_0001>
module attributes {stable_mosaic.version = 11 : i64} {
  func.func @gcn_layer1_kernel(%arg0: i32, %arg1: memref<128x384xbf16, #tpu.memory_space<vmem>>, %arg2: memref<384x16xbf16, #tpu.memory_space<vmem>>, %arg3: memref<16x128xbf16, #tpu.memory_space<vmem>>, %arg4: memref<1x128xf32, #tpu.memory_space<vmem>>, %arg5: memref<128x128xbf16, #tpu.memory_space<vmem>>) attributes {dimension_semantics = [#tpu.dimension_semantics<parallel>], iteration_bounds = array<i64: 3>, scalar_prefetch = 0 : i64, scratch_operands = 0 : i64, tpu.core_type = #tpu.core_type<tc>, window_params = [{transform_indices = @transform_0, window_bounds = array<i64: 128, 384>}, {pipeline_mode = #tpu.pipeline_mode<synchronous>, transform_indices = @transform_1, window_bounds = array<i64: 384, 16>}, {pipeline_mode = #tpu.pipeline_mode<synchronous>, transform_indices = @transform_2, window_bounds = array<i64: 16, 128>}, {pipeline_mode = #tpu.pipeline_mode<synchronous>, transform_indices = @transform_3, window_bounds = array<i64: 1, 128>}, {transform_indices = @transform_4, window_bounds = array<i64: 128, 128>}]} {
    %c0 = arith.constant 0 : index
    %c0_0 = arith.constant 0 : index
    %0 = vector.load %arg1[%c0, %c0_0] : memref<128x384xbf16, #tpu.memory_space<vmem>>, vector<128x384xbf16>
    %c0_1 = arith.constant 0 : index
    %c0_2 = arith.constant 0 : index
    %1 = vector.load %arg2[%c0_1, %c0_2] : memref<384x16xbf16, #tpu.memory_space<vmem>>, vector<384x16xbf16>
    %cst = arith.constant dense<0.000000e+00> : vector<128x16xf32>
    %2 = tpu.matmul %0, %1, %cst {dimension_numbers = #tpu.dot_dimension_numbers<[1], [0], [0], [1], [0, 0, 1, 1], [], []>} : vector<128x384xbf16>, vector<384x16xbf16>, vector<128x16xf32> -> vector<128x16xf32>
    %3 = arith.truncf %2 : vector<128x16xf32> to vector<128x16xbf16>
    %c0_3 = arith.constant 0 : index
    %c0_4 = arith.constant 0 : index
    %4 = vector.load %arg3[%c0_3, %c0_4] : memref<16x128xbf16, #tpu.memory_space<vmem>>, vector<16x128xbf16>
    %cst_5 = arith.constant dense<0.000000e+00> : vector<128x128xf32>
    %5 = tpu.matmul %3, %4, %cst_5 {dimension_numbers = #tpu.dot_dimension_numbers<[1], [0], [0], [1], [0, 0, 1, 1], [], []>} : vector<128x16xbf16>, vector<16x128xbf16>, vector<128x128xf32> -> vector<128x128xf32>
    %c0_6 = arith.constant 0 : index
    %c0_7 = arith.constant 0 : index
    %6 = vector.load %arg4[%c0_6, %c0_7] : memref<1x128xf32, #tpu.memory_space<vmem>>, vector<1x128xf32>
    %7 = vector.broadcast %6 : vector<1x128xf32> to vector<128x128xf32>
    %8 = arith.addf %5, %7 : vector<128x128xf32>
    %cst_8 = arith.constant 0.000000e+00 : f32
    %9 = vector.broadcast %cst_8 : f32 to vector<128x128xf32>
    %10 = arith.maximumf %8, %9 : vector<128x128xf32>
    %11 = arith.truncf %10 : vector<128x128xf32> to vector<128x128xbf16>
    %c0_9 = arith.constant 0 : index
    %c0_10 = arith.constant 0 : index
    %12 = vector.load %arg5[%c0_9, %c0_10] : memref<128x128xbf16, #tpu.memory_space<vmem>>, vector<128x128xbf16>
    tpu.vector_store %arg5[%c0_9, %c0_10], %11 {strides = array<i32>} : memref<128x128xbf16, #tpu.memory_space<vmem>>, vector<128x128xbf16>,
    return
  }
  func.func @transform_0(%arg0: i32) -> (i32, i32) {
    %c0_i32 = arith.constant 0 : i32
    %c0_i32_0 = arith.constant 0 : i32
    return %arg0, %c0_i32 : i32, i32
  }
  func.func @transform_1(%arg0: i32) -> (i32, i32) {
    %c0_i32 = arith.constant 0 : i32
    %c0_i32_0 = arith.constant 0 : i32
    %c0_i32_1 = arith.constant 0 : i32
    return %c0_i32, %c0_i32_0 : i32, i32
  }
  func.func @transform_2(%arg0: i32) -> (i32, i32) {
    %c0_i32 = arith.constant 0 : i32
    %c0_i32_0 = arith.constant 0 : i32
    %c0_i32_1 = arith.constant 0 : i32
    return %c0_i32, %c0_i32_0 : i32, i32
  }
  func.func @transform_3(%arg0: i32) -> (i32, i32) {
    %c0_i32 = arith.constant 0 : i32
    %c0_i32_0 = arith.constant 0 : i32
    %c0_i32_1 = arith.constant 0 : i32
    return %c0_i32, %c0_i32_0 : i32, i32
  }
  func.func @transform_4(%arg0: i32) -> (i32, i32) {
    %c0_i32 = arith.constant 0 : i32
    %c0_i32_0 = arith.constant 0 : i32
    return %arg0, %c0_i32 : i32, i32
  }
}

</mosaic_0001>

<llo_original>
// kernel: tpu_custom_call.1
$region0: #{tpu_custom_call.1}
  #allocation0 [shape = 'u32[]', space=smem, size = 0x4, offset = 0x4, fixed_abs, tag = 'smem constant byte address 0x4 - core index']
  #allocation1 [shape = 'u32[72,128]{1,0:T(1,128)}', space=vmem, size = 0x9000, scoped, tag = 'internal scratch']
  %s0 = inlined_call_operand.hbm [shape: bf16[384,384], index: 0, kind: input, shape index: {}]
  %s1 = inlined_call_operand.vmem [shape: bf16[384,16], index: 1, kind: input, shape index: {}]
  %s2 = inlined_call_operand.vmem [shape: bf16[16,128], index: 2, kind: input, shape index: {}]
  %s3 = inlined_call_operand.vmem [shape: f32[1,128], index: 3, kind: input, shape index: {}]
  %s4 = inlined_call_operand.hbm [shape: bf16[384,128], index: 4, kind: output, shape index: {}]
  %s5 = sld [smem:[#allocation0]]
  $region53: #{tpu_custom_call.1} parent=0
    _
  %s7 = ssub.s32 1, %s5
  %s8 = scalar_select 0, %s7, %s5
  $region1: #{tpu_custom_call.1} parent=0
    #allocation2 [shape = 'u8[196608]{0}', space=vmem, size = 0x30000, scoped, tag = 'input window, operand 0']
    #allocation3 [shape = 's32[2]{0}', space=sflag, size = 0x8, scoped, tag = 'scoped memory for tpu_custom_call.1']
    #allocation4 [shape = 's32[2]{0}', space=sflag, size = 0x8, scoped, tag = 'scoped memory for tpu_custom_call.1']
    #allocation5 [shape = 'u8[65536]{0}', space=vmem, size = 0x10000, scoped, tag = 'output window, operand 0']
    %9 = vsyncpa [#allocation3], 0
    %s10 = scalar_lea.sflag [#allocation3], 1
    %11 = vsyncpa %s10, 0
    %12 = vsyncpa [#allocation4], 0
    %s13 = scalar_lea.sflag [#allocation4], 1
    %14 = vsyncpa %s13, 0
    loop: start=0, step=1, limit=5
    $region2: #{tpu_custom_call.1} parent=1 // loop_pre_header
      _
    $region3: #{tpu_custom_call.1} parent=1 // loop_header
      %s16 = sphi 0, %s20
      %p17 = scmp.ge.s32.totalorder %s16, 5
      %s26 = sphi 0, %s28
      %s29 = sphi 0, %s26
      %s30 = sphi 0, %s29
      %s46 = sphi 0, %s30
      %s50 = sphi 0, %s50
      %s52 = sphi 0, %s50
      %s53 = sphi 0, %s52
      %s67 = sphi 0, %s53
      %s71 = sphi 0, %s71
      %s73 = sphi 0, %s71
      %s74 = sphi 0, %s73
      %s88 = sphi 0, %s74
      %s92 = sphi 0, %s92
      %s94 = sphi 0, %s92
      %s95 = sphi 0, %s94
      %s109 = sphi 0, %s95
      %s115 = sphi 0, %s117
      %s118 = sphi 0, %s115
      %s119 = sphi 0, %s118
      %s135 = sphi 0, %s119
    $region4: #{tpu_custom_call.1} parent=1 // loop_header_branch
      %19 = sbr.rel (%p17) target = $region8
    $region5: #{tpu_custom_call.1} parent=1 // loop_body
      %s21 = ssub.s32 %s16, 1
      %s22 = ssub.s32 %s16, 2
      %s23 = sadd.s32 %s16, 1
      %s24 = ssub.s32 %s16, %s23
      %p25 = scmp.eq.s32.totalorder %s24, 0
      %s27 = sadd.s32 %s26, 1
      %s28 = scalar_select %p25, %s26, %s27
      %p31 = pneg %p25
      %p32 = scmp.eq.s32.totalorder %s16, 2
      %p33 = por %p31, %p32
      %p34 = scmp.ne.s32.totalorder %s26, %s29
      %p35 = scmp.eq.s32.totalorder %s16, 0
      %p36 = por %p34, %p35
      %p37 = scmp.ne.s32.totalorder %s26, %s29
      %p38 = scmp.eq.s32.totalorder %s21, 2
      %p39 = por %p37, %p38
      %p40 = scmp.ne.s32.totalorder %s29, %s30
      %p41 = scmp.eq.s32.totalorder %s21, 0
      %p42 = por %p40, %p41
      %p43 = scmp.ne.s32.totalorder %s29, %s30
      %p44 = scmp.eq.s32.totalorder %s22, 2
      %p45 = por %p43, %p44
      %p47 = scmp.ne.s32.totalorder %s30, %s46
      %p48 = scmp.eq.s32.totalorder %s22, 0
      %p49 = por %p47, %p48
      %s51 = sadd.s32 %s50, 1
      %p54 = scmp.eq.s32.totalorder %s16, 2
      %p55 = scmp.ne.s32.totalorder %s50, %s52
      %p56 = scmp.eq.s32.totalorder %s16, 0
      %p57 = por %p55, %p56
      %p58 = scmp.ne.s32.totalorder %s50, %s52
      %p59 = scmp.eq.s32.totalorder %s21, 2
      %p60 = por %p58, %p59
      %p61 = scmp.ne.s32.totalorder %s52, %s53
      %p62 = scmp.eq.s32.totalorder %s21, 0
      %p63 = por %p61, %p62
      %p64 = scmp.ne.s32.totalorder %s52, %s53
      %p65 = scmp.eq.s32.totalorder %s22, 2
      %p66 = por %p64, %p65
      %p68 = scmp.ne.s32.totalorder %s53, %s67
      %p69 = scmp.eq.s32.totalorder %s22, 0
      %p70 = por %p68, %p69
      %s72 = sadd.s32 %s71, 1
      %p75 = scmp.eq.s32.totalorder %s16, 2
      %p76 = scmp.ne.s32.totalorder %s71, %s73
      %p77 = scmp.eq.s32.totalorder %s16, 0
      %p78 = por %p76, %p77
      %p79 = scmp.ne.s32.totalorder %s71, %s73
      %p80 = scmp.eq.s32.totalorder %s21, 2
      %p81 = por %p79, %p80
      %p82 = scmp.ne.s32.totalorder %s73, %s74
      %p83 = scmp.eq.s32.totalorder %s21, 0
      %p84 = por %p82, %p83
      %p85 = scmp.ne.s32.totalorder %s73, %s74
      %p86 = scmp.eq.s32.totalorder %s22, 2
      %p87 = por %p85, %p86
      %p89 = scmp.ne.s32.totalorder %s74, %s88
      %p90 = scmp.eq.s32.totalorder %s22, 0
      %p91 = por %p89, %p90
      %s93 = sadd.s32 %s92, 1
      %p96 = scmp.eq.s32.totalorder %s16, 2
      %p97 = scmp.ne.s32.totalorder %s92, %s94
      %p98 = scmp.eq.s32.totalorder %s16, 0
      %p99 = por %p97, %p98
      %p100 = scmp.ne.s32.totalorder %s92, %s94
      %p101 = scmp.eq.s32.totalorder %s21, 2
      %p102 = por %p100, %p101
      %p103 = scmp.ne.s32.totalorder %s94, %s95
      %p104 = scmp.eq.s32.totalorder %s21, 0
      %p105 = por %p103, %p104
      %p106 = scmp.ne.s32.totalorder %s94, %s95
      %p107 = scmp.eq.s32.totalorder %s22, 2
      %p108 = por %p106, %p107
      %p110 = scmp.ne.s32.totalorder %s95, %s109
      %p111 = scmp.eq.s32.totalorder %s22, 0
      %p112 = por %p110, %p111
      %s113 = ssub.s32 %s16, %s23
      %p114 = scmp.eq.s32.totalorder %s113, 0
      %s116 = sadd.s32 %s115, 1
      %s117 = scalar_select %p114, %s115, %s116
      %p120 = pneg %p114
      %p121 = scmp.eq.s32.totalorder %s16, 2
      %p122 = por %p120, %p121
      %p123 = scmp.ne.s32.totalorder %s115, %s118
      %p124 = scmp.eq.s32.totalorder %s16, 0
      %p125 = por %p123, %p124
      %p126 = scmp.ne.s32.totalorder %s115, %s118
      %p127 = scmp.eq.s32.totalorder %s21, 2
      %p128 = por %p126, %p127
      %p129 = scmp.ne.s32.totalorder %s118, %s119
      %p130 = scmp.eq.s32.totalorder %s21, 0
      %p131 = por %p129, %p130
      %p132 = scmp.ne.s32.totalorder %s118, %s119
      %p133 = scmp.eq.s32.totalorder %s22, 2
      %p134 = por %p132, %p133
      %p136 = scmp.ne.s32.totalorder %s119, %s135
      %p137 = scmp.eq.s32.totalorder %s22, 0
      %p138 = por %p136, %p137
      %p139 = scmp.le.s32.totalorder 1, %s16
      %p140 = scmp.lt.s32.totalorder %s16, 4
      %p141 = pnand %p139, %p140
      %p142 = pneg %p141
      // Predicated region
      $region9: #{tpu_custom_call.1} parent=5 // pred_check
        _
      $region10: #{tpu_custom_call.1} parent=5 // pred_check_branch
        %144 = sbr.rel (%p141) target = $region12
      $region11: #{tpu_custom_call.1} parent=5 // pred_region
        %s145 = ssub.s32 %s16, 1
        // Predicated region
        $region13: #{tpu_custom_call.1} parent=11 // pred_check
          %p146 = pneg %p63
        $region14: #{tpu_custom_call.1} parent=11 // pred_check_branch
          %148 = sbr.rel (%p146) target = $region16
        $region15: #{tpu_custom_call.1} parent=11 // pred_region
          _
        $region16: #{tpu_custom_call.1} parent=11 // pred_fallthru
          _
        // Predicated region
        $region17: #{tpu_custom_call.1} parent=11 // pred_check
          %p149 = pneg %p84
        $region18: #{tpu_custom_call.1} parent=11 // pred_check_branch
          %151 = sbr.rel (%p149) target = $region20
        $region19: #{tpu_custom_call.1} parent=11 // pred_region
          _
        $region20: #{tpu_custom_call.1} parent=11 // pred_fallthru
          _
        // Predicated region
        $region21: #{tpu_custom_call.1} parent=11 // pred_check
          %p152 = pneg %p105
        $region22: #{tpu_custom_call.1} parent=11 // pred_check_branch
          %154 = sbr.rel (%p152) target = $region24
        $region23: #{tpu_custom_call.1} parent=11 // pred_region
          _
        $region24: #{tpu_custom_call.1} parent=11 // pred_fallthru
          _
      $region12: #{tpu_custom_call.1} parent=5 // pred_fallthru
        _
      %p155 = scmp.lt.s32.totalorder %s16, 3
      // Predicated region
      $region25: #{tpu_custom_call.1} parent=5 // pred_check
        %p156 = pneg %p155
      $region26: #{tpu_custom_call.1} parent=5 // pred_check_branch
        %158 = sbr.rel (%p156) target = $region28
      $region27: #{tpu_custom_call.1} parent=5 // pred_region
        // Predicated region
        $region29: #{tpu_custom_call.1} parent=27 // pred_check
          %p159 = pneg %p36
        $region30: #{tpu_custom_call.1} parent=27 // pred_check_branch
          %161 = sbr.rel (%p159) target = $region32
        $region31: #{tpu_custom_call.1} parent=27 // pred_region
          %s162 = sand.u32 %s26, 1
          %s163 = scalar_lea.sflag [#allocation3], %s162
          %s164 = sand.u32 %s26, 1
          %s165 = smul.addr %s164, 192
          %s166 = scalar_lea.vmem [#allocation2], %s165
          %s167 = smul.u32 16, %s16
          %169 = vsyncadd %s163, 0
          %s170 = smul.addr %s167, 3
          %s171 = smul.addr %s170, 4
          %s172 = scalar_lea.hbm %s0, %s171
          %s173 = sshll.u32 %s172, 4
          %s174 = int_to_ptr.hbm [resolvable:$true] %s173
          %s175 = sshll.u32 %s166, 4
          %s176 = int_to_ptr.vmem [resolvable:$true] %s175
          %181 = dma.hbm_to_vmem [thread:$0]  %s174, 3072, %s176, %s163, 192, 192, 12
        $region32: #{tpu_custom_call.1} parent=27 // pred_fallthru
          _
      $region28: #{tpu_custom_call.1} parent=5 // pred_fallthru
        _
      %p182 = scmp.le.s32.totalorder 1, %s16
      %p183 = scmp.lt.s32.totalorder %s16, 4
      %p184 = pnand %p182, %p183
      %p185 = pneg %p184
      // Predicated region
      $region33: #{tpu_custom_call.1} parent=5 // pred_check
        _
      $region34: #{tpu_custom_call.1} parent=5 // pred_check_branch
        %187 = sbr.rel (%p184) target = $region36
      $region35: #{tpu_custom_call.1} parent=5 // pred_region
        %s188 = ssub.s32 %s16, 1
        %s189 = sand.u32 %s29, 1
        %s190 = scalar_lea.sflag [#allocation3], %s189
        %s191 = sand.u32 %s29, 1
        %s192 = smul.addr %s191, 192
        %s193 = scalar_lea.vmem [#allocation2], %s192
        // Predicated region
        $region37: #{tpu_custom_call.1} parent=35 // pred_check
          %p194 = pneg %p42
        $region38: #{tpu_custom_call.1} parent=35 // pred_check_branch
          %196 = sbr.rel (%p194) target = $region40
        $region39: #{tpu_custom_call.1} parent=35 // pred_region
          %198 = dma.done %s190, 3072
        $region40: #{tpu_custom_call.1} parent=35 // pred_fallthru
          _
        %s199 = sand.u32 %s29, 1
        %s200 = scalar_lea.sflag [#allocation3], %s199
        %s201 = sand.u32 %s29, 1
        %s202 = smul.addr %s201, 192
        %s203 = scalar_lea.vmem [#allocation2], %s202
        %p204 = pneg %p42
        %p205 = pneg %p39
        %p206 = pneg %p63
        %p207 = pneg %p60
        %p208 = pneg %p84
        %p209 = pneg %p81
        %p210 = pneg %p105
        %p211 = pneg %p102
        %p212 = pneg %p131
        %p213 = pneg %p128
        %s214 = sand.u32 %s118, 1
        %s215 = scalar_lea.sflag [#allocation4], %s214
        %s216 = sand.u32 %s118, 1
        %s217 = smul.addr %s216, 64
        %s218 = scalar_lea.vmem [#allocation5], %s217
        %s219 = smul.u32 16, %s21
        %s220 = smul.u32 16, %s21
        %v222 = vld [vmem:[%s193] sm:$0xff]
        %v223 = vld [vmem:[%s193 + $0x8] sm:$0xf]
        %v224 = vld [vmem:[%s193 + $0xc] sm:$0xff]
        %v225 = vld [vmem:[%s193 + $0x14] sm:$0xf]
        %v226 = vld [vmem:[%s193 + $0x18] sm:$0xff]
        %v227 = vld [vmem:[%s193 + $0x20] sm:$0xf]
        %v228 = vld [vmem:[%s193 + $0x24] sm:$0xff]
        %v229 = vld [vmem:[%s193 + $0x2c] sm:$0xf]
        %v230 = vld [vmem:[%s193 + $0x30] sm:$0xff]
        %v231 = vld [vmem:[%s193 + $0x38] sm:$0xf]
        %v232 = vld [vmem:[%s193 + $0x3c] sm:$0xff]
        %v233 = vld [vmem:[%s193 + $0x44] sm:$0xf]
        %v234 = vld [vmem:[%s193 + $0x48] sm:$0xff]
        %v235 = vld [vmem:[%s193 + $0x50] sm:$0xf]
        %v236 = vld [vmem:[%s193 + $0x54] sm:$0xff]
        %v237 = vld [vmem:[%s193 + $0x5c] sm:$0xf]
        %v238 = vld [vmem:[%s193 + $0x60] sm:$0xff]
        %v239 = vld [vmem:[%s193 + $0x68] sm:$0xf]
        %v240 = vld [vmem:[%s193 + $0x6c] sm:$0xff]
        %v241 = vld [vmem:[%s193 + $0x74] sm:$0xf]
        %v242 = vld [vmem:[%s193 + $0x78] sm:$0xff]
        %v243 = vld [vmem:[%s193 + $0x80] sm:$0xf]
        %v244 = vld [vmem:[%s193 + $0x84] sm:$0xff]
        %v245 = vld [vmem:[%s193 + $0x8c] sm:$0xf]
        %v246 = vld [vmem:[%s193 + $0x90] sm:$0xff]
        %v247 = vld [vmem:[%s193 + $0x98] sm:$0xf]
        %v248 = vld [vmem:[%s193 + $0x9c] sm:$0xff]
        %v249 = vld [vmem:[%s193 + $0xa4] sm:$0xf]
        %v250 = vld [vmem:[%s193 + $0xa8] sm:$0xff]
        %v251 = vld [vmem:[%s193 + $0xb0] sm:$0xf]
        %v252 = vld [vmem:[%s193 + $0xb4] sm:$0xff]
        %v253 = vld [vmem:[%s193 + $0xbc] sm:$0xf]
        %v254 = vld [vmem:[%s1] sm:$0xf]
        %v255 = vld [vmem:[%s1 + $0x4] sm:$0xf]
        %v256 = vld [vmem:[%s1 + $0x8] sm:$0xf]
        %v257 = vld [vmem:[%s1 + $0xc] sm:$0xf]
        %v258 = vld [vmem:[%s1 + $0x10] sm:$0xf]
        %v259 = vld [vmem:[%s1 + $0x14] sm:$0xf]
        %v260 = vld [vmem:[%s1 + $0x18] sm:$0xf]
        %v261 = vld [vmem:[%s1 + $0x1c] sm:$0xf]
        %v262 = vld [vmem:[%s1 + $0x20] sm:$0xf]
        %v263 = vld [vmem:[%s1 + $0x24] sm:$0xf]
        %v264 = vld [vmem:[%s1 + $0x28] sm:$0xf]
        %v265 = vld [vmem:[%s1 + $0x2c] sm:$0xf]
        %v266 = vld [vmem:[%s1 + $0x30] sm:$0xf]
        %v267 = vld [vmem:[%s1 + $0x34] sm:$0xf]
        %v268 = vld [vmem:[%s1 + $0x38] sm:$0xf]
        %v269 = vld [vmem:[%s1 + $0x3c] sm:$0xf]
        %v270 = vld [vmem:[%s1 + $0x40] sm:$0xf]
        %v271 = vld [vmem:[%s1 + $0x44] sm:$0xf]
        %v272 = vld [vmem:[%s1 + $0x48] sm:$0xf]
        %v273 = vld [vmem:[%s1 + $0x4c] sm:$0xf]
        %v274 = vld [vmem:[%s1 + $0x50] sm:$0xf]
        %v275 = vld [vmem:[%s1 + $0x54] sm:$0xf]
        %v276 = vld [vmem:[%s1 + $0x58] sm:$0xf]
        %v277 = vld [vmem:[%s1 + $0x5c] sm:$0xf]
        %v278 = vld [vmem:[%s1 + $0x60] sm:$0xf]
        %v279 = vld [vmem:[%s1 + $0x64] sm:$0xf]
        %v280 = vld [vmem:[%s1 + $0x68] sm:$0xf]
        %v281 = vld [vmem:[%s1 + $0x6c] sm:$0xf]
        %v282 = vld [vmem:[%s1 + $0x70] sm:$0xf]
        %v283 = vld [vmem:[%s1 + $0x74] sm:$0xf]
        %v284 = vld [vmem:[%s1 + $0x78] sm:$0xf]
        %v285 = vld [vmem:[%s1 + $0x7c] sm:$0xf]
        %v286 = vld [vmem:[%s1 + $0x80] sm:$0xf]
        %v287 = vld [vmem:[%s1 + $0x84] sm:$0xf]
        %v288 = vld [vmem:[%s1 + $0x88] sm:$0xf]
        %v289 = vld [vmem:[%s1 + $0x8c] sm:$0xf]
        %v290 = vld [vmem:[%s1 + $0x90] sm:$0xf]
        %v291 = vld [vmem:[%s1 + $0x94] sm:$0xf]
        %v292 = vld [vmem:[%s1 + $0x98] sm:$0xf]
        %v293 = vld [vmem:[%s1 + $0x9c] sm:$0xf]
        %v294 = vld [vmem:[%s1 + $0xa0] sm:$0xf]
        %v295 = vld [vmem:[%s1 + $0xa4] sm:$0xf]
        %v296 = vld [vmem:[%s1 + $0xa8] sm:$0xf]
        %v297 = vld [vmem:[%s1 + $0xac] sm:$0xf]
        %v298 = vld [vmem:[%s1 + $0xb0] sm:$0xf]
        %v299 = vld [vmem:[%s1 + $0xb4] sm:$0xf]
        %v300 = vld [vmem:[%s1 + $0xb8] sm:$0xf]
        %v301 = vld [vmem:[%s1 + $0xbc] sm:$0xf]
        %v334 = vunpack.c.l.b16 %v222
        %v335 = vunpack.c.h.b16 %v222
        %v336 = vunpack.c.l.b16 %v223
        %v337 = vunpack.c.l.b16 %v224
        %v338 = vunpack.c.h.b16 %v224
        %v339 = vunpack.c.l.b16 %v225
        %v340 = vunpack.c.l.b16 %v226
        %v341 = vunpack.c.h.b16 %v226
        %v342 = vunpack.c.l.b16 %v227
        %v343 = vunpack.c.l.b16 %v228
        %v344 = vunpack.c.h.b16 %v228
        %v345 = vunpack.c.l.b16 %v229
        %v346 = vunpack.c.l.b16 %v230
        %v347 = vunpack.c.h.b16 %v230
        %v348 = vunpack.c.l.b16 %v231
        %v349 = vunpack.c.l.b16 %v232
        %v350 = vunpack.c.h.b16 %v232
        %v351 = vunpack.c.l.b16 %v233
        %v352 = vunpack.c.l.b16 %v234
        %v353 = vunpack.c.h.b16 %v234
        %v354 = vunpack.c.l.b16 %v235
        %v355 = vunpack.c.l.b16 %v236
        %v356 = vunpack.c.h.b16 %v236
        %v357 = vunpack.c.l.b16 %v237
        %v358 = vunpack.c.l.b16 %v238
        %v359 = vunpack.c.h.b16 %v238
        %v360 = vunpack.c.l.b16 %v239
        %v361 = vunpack.c.l.b16 %v240
        %v362 = vunpack.c.h.b16 %v240
        %v363 = vunpack.c.l.b16 %v241
        %v364 = vunpack.c.l.b16 %v242
        %v365 = vunpack.c.h.b16 %v242
        %v366 = vunpack.c.l.b16 %v243
        %v367 = vunpack.c.l.b16 %v244
        %v368 = vunpack.c.h.b16 %v244
        %v369 = vunpack.c.l.b16 %v245
        %v370 = vunpack.c.l.b16 %v246
        %v371 = vunpack.c.h.b16 %v246
        %v372 = vunpack.c.l.b16 %v247
        %v373 = vunpack.c.l.b16 %v248
        %v374 = vunpack.c.h.b16 %v248
        %v375 = vunpack.c.l.b16 %v249
        %v376 = vunpack.c.l.b16 %v250
        %v377 = vunpack.c.h.b16 %v250
        %v378 = vunpack.c.l.b16 %v251
        %v379 = vunpack.c.l.b16 %v252
        %v380 = vunpack.c.h.b16 %v252
        %v381 = vunpack.c.l.b16 %v253
        %v382 = vpack.c.b16 %v337, %v334
        %v383 = vpack.c.b16 %v338, %v335
        %v384 = vpack.c.b16 %v339, %v336
        %v385 = vpack.c.b16 %v343, %v340
        %v386 = vpack.c.b16 %v344, %v341
        %v387 = vpack.c.b16 %v345, %v342
        %v388 = vpack.c.b16 %v349, %v346
        %v389 = vpack.c.b16 %v350, %v347
        %v390 = vpack.c.b16 %v351, %v348
        %v391 = vpack.c.b16 %v355, %v352
        %v392 = vpack.c.b16 %v356, %v353
        %v393 = vpack.c.b16 %v357, %v354
        %v394 = vpack.c.b16 %v361, %v358
        %v395 = vpack.c.b16 %v362, %v359
        %v396 = vpack.c.b16 %v363, %v360
        %v397 = vpack.c.b16 %v367, %v364
        %v398 = vpack.c.b16 %v368, %v365
        %v399 = vpack.c.b16 %v369, %v366
        %v400 = vpack.c.b16 %v373, %v370
        %v401 = vpack.c.b16 %v374, %v371
        %v402 = vpack.c.b16 %v375, %v372
        %v403 = vpack.c.b16 %v379, %v376
        %v404 = vpack.c.b16 %v380, %v377
        %v405 = vpack.c.b16 %v381, %v378
        %v478 = vunpack.c.l.b16 %v254
        %v479 = vunpack.c.l.b16 %v255
        %v480 = vunpack.c.l.b16 %v256
        %v481 = vunpack.c.l.b16 %v257
        %v482 = vunpack.c.l.b16 %v258
        %v483 = vunpack.c.l.b16 %v259
        %v484 = vunpack.c.l.b16 %v260
        %v485 = vunpack.c.l.b16 %v261
        %v486 = vunpack.c.l.b16 %v262
        %v487 = vunpack.c.l.b16 %v263
        %v488 = vunpack.c.l.b16 %v264
        %v489 = vunpack.c.l.b16 %v265
        %v490 = vunpack.c.l.b16 %v266
        %v491 = vunpack.c.l.b16 %v267
        %v492 = vunpack.c.l.b16 %v268
        %v493 = vunpack.c.l.b16 %v269
        %v494 = vunpack.c.l.b16 %v270
        %v495 = vunpack.c.l.b16 %v271
        %v496 = vunpack.c.l.b16 %v272
        %v497 = vunpack.c.l.b16 %v273
        %v498 = vunpack.c.l.b16 %v274
        %v499 = vunpack.c.l.b16 %v275
        %v500 = vunpack.c.l.b16 %v276
        %v501 = vunpack.c.l.b16 %v277
        %v502 = vunpack.c.l.b16 %v278
        %v503 = vunpack.c.l.b16 %v279
        %v504 = vunpack.c.l.b16 %v280
        %v505 = vunpack.c.l.b16 %v281
        %v506 = vunpack.c.l.b16 %v282
        %v507 = vunpack.c.l.b16 %v283
        %v508 = vunpack.c.l.b16 %v284
        %v509 = vunpack.c.l.b16 %v285
        %v510 = vunpack.c.l.b16 %v286
        %v511 = vunpack.c.l.b16 %v287
        %v512 = vunpack.c.l.b16 %v288
        %v513 = vunpack.c.l.b16 %v289
        %v514 = vunpack.c.l.b16 %v290
        %v515 = vunpack.c.l.b16 %v291
        %v516 = vunpack.c.l.b16 %v292
        %v517 = vunpack.c.l.b16 %v293
        %v518 = vunpack.c.l.b16 %v294
        %v519 = vunpack.c.l.b16 %v295
        %v520 = vunpack.c.l.b16 %v296
        %v521 = vunpack.c.l.b16 %v297
        %v522 = vunpack.c.l.b16 %v298
        %v523 = vunpack.c.l.b16 %v299
        %v524 = vunpack.c.l.b16 %v300
        %v525 = vunpack.c.l.b16 %v301
        %v526 = vpack.c.b16 %v479, %v478
        %v527 = vpack.c.b16 %v481, %v480
        %v528 = vpack.c.b16 %v483, %v482
        %v529 = vpack.c.b16 %v485, %v484
        %v530 = vpack.c.b16 %v487, %v486
        %v531 = vpack.c.b16 %v489, %v488
        %v532 = vpack.c.b16 %v491, %v490
        %v533 = vpack.c.b16 %v493, %v492
        %v534 = vpack.c.b16 %v495, %v494
        %v535 = vpack.c.b16 %v497, %v496
        %v536 = vpack.c.b16 %v499, %v498
        %v537 = vpack.c.b16 %v501, %v500
        %v538 = vpack.c.b16 %v503, %v502
        %v539 = vpack.c.b16 %v505, %v504
        %v540 = vpack.c.b16 %v507, %v506
        %v541 = vpack.c.b16 %v509, %v508
        %v542 = vpack.c.b16 %v511, %v510
        %v543 = vpack.c.b16 %v513, %v512
        %v544 = vpack.c.b16 %v515, %v514
        %v545 = vpack.c.b16 %v517, %v516
        %v546 = vpack.c.b16 %v519, %v518
        %v547 = vpack.c.b16 %v521, %v520
        %v548 = vpack.c.b16 %v523, %v522
        %v549 = vpack.c.b16 %v525, %v524
        %574 = vmatpush.bf16.msra.mxu0 %v533
        %575 = vmatpush.bf16.msra.mxu0 %v532
        %576 = vmatpush.bf16.msra.mxu0 %v531
        %577 = vmatpush.bf16.msra.mxu0 %v530
        %578 = vmatpush.bf16.msra.mxu0 %v529
        %579 = vmatpush.bf16.msra.mxu0 %v528
        %580 = vmatpush.bf16.msra.mxu0 %v527
        %581 = vmatpush.bf16.msra.mxu0 %v526
        %582 = vmatmul.bf16.gmra.mxu0 %v382
        %v583 = vpop.f32.mrf.mxu0
        %v584 = vadd.f32 0.0, %v583
        %v585 = vpop.f32.mrf.mxu0
        %v586 = vadd.f32 0.0, %v585
        %587 = vmatmul.bf16.gmra.mxu0 %v385
        %v588 = vpop.f32.mrf.mxu0
        %v589 = vadd.f32 0.0, %v588
        %v590 = vpop.f32.mrf.mxu0
        %v591 = vadd.f32 0.0, %v590
        %592 = vmatmul.bf16.gmra.mxu0 %v388
        %v593 = vpop.f32.mrf.mxu0
        %v594 = vadd.f32 0.0, %v593
        %v595 = vpop.f32.mrf.mxu0
        %v596 = vadd.f32 0.0, %v595
        %597 = vmatmul.bf16.gmra.mxu0 %v391
        %v598 = vpop.f32.mrf.mxu0
        %v599 = vadd.f32 0.0, %v598
        %v600 = vpop.f32.mrf.mxu0
        %v601 = vadd.f32 0.0, %v600
        %602 = vmatmul.bf16.gmra.mxu0 %v394
        %v603 = vpop.f32.mrf.mxu0
        %v604 = vadd.f32 0.0, %v603
        %v605 = vpop.f32.mrf.mxu0
        %v606 = vadd.f32 0.0, %v605
        %607 = vmatmul.bf16.gmra.mxu0 %v397
        %v608 = vpop.f32.mrf.mxu0
        %v609 = vadd.f32 0.0, %v608
        %v610 = vpop.f32.mrf.mxu0
        %v611 = vadd.f32 0.0, %v610
        %612 = vmatmul.bf16.gmra.mxu0 %v400
        %v613 = vpop.f32.mrf.mxu0
        %v614 = vadd.f32 0.0, %v613
        %v615 = vpop.f32.mrf.mxu0
        %v616 = vadd.f32 0.0, %v615
        %617 = vmatmul.bf16.gmra.mxu0 %v403
        %v618 = vpop.f32.mrf.mxu0
        %v619 = vadd.f32 0.0, %v618
        %v620 = vpop.f32.mrf.mxu0
        %v621 = vadd.f32 0.0, %v620
        %622 = vdwg.mxu0
        %623 = vmatpush.bf16.msra.mxu0 %v541
        %624 = vmatpush.bf16.msra.mxu0 %v540
        %625 = vmatpush.bf16.msra.mxu0 %v539
        %626 = vmatpush.bf16.msra.mxu0 %v538
        %627 = vmatpush.bf16.msra.mxu0 %v537
        %628 = vmatpush.bf16.msra.mxu0 %v536
        %629 = vmatpush.bf16.msra.mxu0 %v535
        %630 = vmatpush.bf16.msra.mxu0 %v534
        %631 = vmatmul.bf16.gmra.mxu0 %v383
        %v632 = vpop.f32.mrf.mxu0
        %v633 = vadd.f32 %v584, %v632
        %v634 = vpop.f32.mrf.mxu0
        %v635 = vadd.f32 %v586, %v634
        %636 = vmatmul.bf16.gmra.mxu0 %v386
        %v637 = vpop.f32.mrf.mxu0
        %v638 = vadd.f32 %v589, %v637
        %v639 = vpop.f32.mrf.mxu0
        %v640 = vadd.f32 %v591, %v639
        %641 = vmatmul.bf16.gmra.mxu0 %v389
        %v642 = vpop.f32.mrf.mxu0
        %v643 = vadd.f32 %v594, %v642
        %v644 = vpop.f32.mrf.mxu0
        %v645 = vadd.f32 %v596, %v644
        %646 = vmatmul.bf16.gmra.mxu0 %v392
        %v647 = vpop.f32.mrf.mxu0
        %v648 = vadd.f32 %v599, %v647
        %v649 = vpop.f32.mrf.mxu0
        %v650 = vadd.f32 %v601, %v649
        %651 = vmatmul.bf16.gmra.mxu0 %v395
        %v652 = vpop.f32.mrf.mxu0
        %v653 = vadd.f32 %v604, %v652
        %v654 = vpop.f32.mrf.mxu0
        %v655 = vadd.f32 %v606, %v654
        %656 = vmatmul.bf16.gmra.mxu0 %v398
        %v657 = vpop.f32.mrf.mxu0
        %v658 = vadd.f32 %v609, %v657
        %v659 = vpop.f32.mrf.mxu0
        %v660 = vadd.f32 %v611, %v659
        %661 = vmatmul.bf16.gmra.mxu0 %v401
        %v662 = vpop.f32.mrf.mxu0
        %v663 = vadd.f32 %v614, %v662
        %v664 = vpop.f32.mrf.mxu0
        %v665 = vadd.f32 %v616, %v664
        %666 = vmatmul.bf16.gmra.mxu0 %v404
        %v667 = vpop.f32.mrf.mxu0
        %v668 = vadd.f32 %v619, %v667
        %v669 = vpop.f32.mrf.mxu0
        %v670 = vadd.f32 %v621, %v669
        %671 = vdwg.mxu0
        %672 = vmatpush.bf16.msra.mxu0 %v549
        %673 = vmatpush.bf16.msra.mxu0 %v548
        %674 = vmatpush.bf16.msra.mxu0 %v547
        %675 = vmatpush.bf16.msra.mxu0 %v546
        %676 = vmatpush.bf16.msra.mxu0 %v545
        %677 = vmatpush.bf16.msra.mxu0 %v544
        %678 = vmatpush.bf16.msra.mxu0 %v543
        %679 = vmatpush.bf16.msra.mxu0 %v542
        %680 = vmatmul.bf16.gmra.mxu0 %v384
        %v681 = vpop.f32.mrf.mxu0
        %v682 = vadd.f32 %v633, %v681
        %v683 = vpop.f32.mrf.mxu0
        %v684 = vadd.f32 %v635, %v683
        %685 = vmatmul.bf16.gmra.mxu0 %v387
        %v686 = vpop.f32.mrf.mxu0
        %v687 = vadd.f32 %v638, %v686
        %v688 = vpop.f32.mrf.mxu0
        %v689 = vadd.f32 %v640, %v688
        %690 = vmatmul.bf16.gmra.mxu0 %v390
        %v691 = vpop.f32.mrf.mxu0
        %v692 = vadd.f32 %v643, %v691
        %v693 = vpop.f32.mrf.mxu0
        %v694 = vadd.f32 %v645, %v693
        %695 = vmatmul.bf16.gmra.mxu0 %v393
        %v696 = vpop.f32.mrf.mxu0
        %v697 = vadd.f32 %v648, %v696
        %v698 = vpop.f32.mrf.mxu0
        %v699 = vadd.f32 %v650, %v698
        %700 = vmatmul.bf16.gmra.mxu0 %v396
        %v701 = vpop.f32.mrf.mxu0
        %v702 = vadd.f32 %v653, %v701
        %v703 = vpop.f32.mrf.mxu0
        %v704 = vadd.f32 %v655, %v703
        %705 = vmatmul.bf16.gmra.mxu0 %v399
        %v706 = vpop.f32.mrf.mxu0
        %v707 = vadd.f32 %v658, %v706
        %v708 = vpop.f32.mrf.mxu0
        %v709 = vadd.f32 %v660, %v708
        %710 = vmatmul.bf16.gmra.mxu0 %v402
        %v711 = vpop.f32.mrf.mxu0
        %v712 = vadd.f32 %v663, %v711
        %v713 = vpop.f32.mrf.mxu0
        %v714 = vadd.f32 %v665, %v713
        %715 = vmatmul.bf16.gmra.mxu0 %v405
        %v716 = vpop.f32.mrf.mxu0
        %v717 = vadd.f32 %v668, %v716
        %v718 = vpop.f32.mrf.mxu0
        %v719 = vadd.f32 %v670, %v718
        %720 = vdwg.mxu0
        %v721 = vpack.c.bf16 %v684, %v682
        %v722 = vpack.c.bf16 %v689, %v687
        %v723 = vpack.c.bf16 %v694, %v692
        %v724 = vpack.c.bf16 %v699, %v697
        %v725 = vpack.c.bf16 %v704, %v702
        %v726 = vpack.c.bf16 %v709, %v707
        %v727 = vpack.c.bf16 %v714, %v712
        %v728 = vpack.c.bf16 %v719, %v717
        %v729 = vld [vmem:[%s2] sm:$0xf]
        %v730 = vld [vmem:[%s2 + $0x4] sm:$0xf]
        %v731 = vld [vmem:[%s3] sm:$0x1]
        %v733 = vperm.slane %v731, 0
        %v737 = vunpack.c.l.b16 %v729
        %v738 = vunpack.c.l.b16 %v730
        %v739 = vpack.c.b16 %v738, %v737
        %vm741 = vcmask 130048
        %v743 = vsel %vm741, %v721, 0
        %v746 = vsel %vm741, %v722, 0
        %v749 = vsel %vm741, %v723, 0
        %v752 = vsel %vm741, %v724, 0
        %v755 = vsel %vm741, %v725, 0
        %v758 = vsel %vm741, %v726, 0
        %v761 = vsel %vm741, %v727, 0
        %v764 = vsel %vm741, %v728, 0
        %766 = vmatpush.bf16.msra.mxu0 0
        %767 = vmatpush.bf16.msra.mxu0 0
        %768 = vmatpush.bf16.msra.mxu0 0
        %769 = vmatpush.bf16.msra.mxu0 0
        %770 = vmatpush.bf16.msra.mxu0 0
        %771 = vmatpush.bf16.msra.mxu0 0
        %772 = vmatpush.bf16.msra.mxu0 0
        %773 = vmatpush.bf16.msra.mxu0 %v739
        %774 = vmatmul.bf16.gmra.mxu0 %v743
        %v775 = vpop.f32.mrf.mxu0
        %v776 = vadd.f32 %v733, %v775
        %v777 = vpop.f32.mrf.mxu0
        %v778 = vadd.f32 %v733, %v777
        %779 = vmatmul.bf16.gmra.mxu0 %v746
        %v780 = vpop.f32.mrf.mxu0
        %v781 = vadd.f32 %v733, %v780
        %v782 = vpop.f32.mrf.mxu0
        %v783 = vadd.f32 %v733, %v782
        %784 = vmatmul.bf16.gmra.mxu0 %v749
        %v785 = vpop.f32.mrf.mxu0
        %v786 = vadd.f32 %v733, %v785
        %v787 = vpop.f32.mrf.mxu0
        %v788 = vadd.f32 %v733, %v787
        %789 = vmatmul.bf16.gmra.mxu0 %v752
        %v790 = vpop.f32.mrf.mxu0
        %v791 = vadd.f32 %v733, %v790
        %v792 = vpop.f32.mrf.mxu0
        %v793 = vadd.f32 %v733, %v792
        %794 = vmatmul.bf16.gmra.mxu0 %v755
        %v795 = vpop.f32.mrf.mxu0
        %v796 = vadd.f32 %v733, %v795
        %v797 = vpop.f32.mrf.mxu0
        %v798 = vadd.f32 %v733, %v797
        %799 = vmatmul.bf16.gmra.mxu0 %v758
        %v800 = vpop.f32.mrf.mxu0
        %v801 = vadd.f32 %v733, %v800
        %v802 = vpop.f32.mrf.mxu0
        %v803 = vadd.f32 %v733, %v802
        %804 = vmatmul.bf16.gmra.mxu0 %v761
        %v805 = vpop.f32.mrf.mxu0
        %v806 = vadd.f32 %v733, %v805
        %v807 = vpop.f32.mrf.mxu0
        %v808 = vadd.f32 %v733, %v807
        %809 = vmatmul.bf16.gmra.mxu0 %v764
        %v810 = vpop.f32.mrf.mxu0
        %v811 = vadd.f32 %v733, %v810
        %v812 = vpop.f32.mrf.mxu0
        %v813 = vadd.f32 %v733, %v812
        %814 = vdwg.mxu0
        %v815 = vmax.f32 %v776, 0.0
        %v816 = vmax.f32 %v778, 0.0
        %v817 = vmax.f32 %v781, 0.0
        %v818 = vmax.f32 %v783, 0.0
        %v819 = vmax.f32 %v786, 0.0
        %v820 = vmax.f32 %v788, 0.0
        %v821 = vmax.f32 %v791, 0.0
        %v822 = vmax.f32 %v793, 0.0
        %v823 = vmax.f32 %v796, 0.0
        %v824 = vmax.f32 %v798, 0.0
        %v825 = vmax.f32 %v801, 0.0
        %v826 = vmax.f32 %v803, 0.0
        %v827 = vmax.f32 %v806, 0.0
        %v828 = vmax.f32 %v808, 0.0
        %v829 = vmax.f32 %v811, 0.0
        %v830 = vmax.f32 %v813, 0.0
        %v831 = vpack.c.bf16 %v815, %v815
        %v832 = vpack.c.bf16 %v816, %v816
        %v833 = vpack.c.bf16 %v817, %v817
        %v834 = vpack.c.bf16 %v818, %v818
        %v835 = vpack.c.bf16 %v819, %v819
        %v836 = vpack.c.bf16 %v820, %v820
        %v837 = vpack.c.bf16 %v821, %v821
        %v838 = vpack.c.bf16 %v822, %v822
        %v839 = vpack.c.bf16 %v823, %v823
        %v840 = vpack.c.bf16 %v824, %v824
        %v841 = vpack.c.bf16 %v825, %v825
        %v842 = vpack.c.bf16 %v826, %v826
        %v843 = vpack.c.bf16 %v827, %v827
        %v844 = vpack.c.bf16 %v828, %v828
        %v845 = vpack.c.bf16 %v829, %v829
        %v846 = vpack.c.bf16 %v830, %v830
        %847 = vst [vmem:[%s218] sm:$0xf] %v831
        %848 = vst [vmem:[%s218 + $0x4] sm:$0xf] %v832
        %849 = vst [vmem:[%s218 + $0x8] sm:$0xf] %v833
        %850 = vst [vmem:[%s218 + $0xc] sm:$0xf] %v834
        %851 = vst [vmem:[%s218 + $0x10] sm:$0xf] %v835
        %852 = vst [vmem:[%s218 + $0x14] sm:$0xf] %v836
        %853 = vst [vmem:[%s218 + $0x18] sm:$0xf] %v837
        %854 = vst [vmem:[%s218 + $0x1c] sm:$0xf] %v838
        %855 = vst [vmem:[%s218 + $0x20] sm:$0xf] %v839
        %856 = vst [vmem:[%s218 + $0x24] sm:$0xf] %v840
        %857 = vst [vmem:[%s218 + $0x28] sm:$0xf] %v841
        %858 = vst [vmem:[%s218 + $0x2c] sm:$0xf] %v842
        %859 = vst [vmem:[%s218 + $0x30] sm:$0xf] %v843
        %860 = vst [vmem:[%s218 + $0x34] sm:$0xf] %v844
        %861 = vst [vmem:[%s218 + $0x38] sm:$0xf] %v845
        %862 = vst [vmem:[%s218 + $0x3c] sm:$0xf] %v846
        %s863 = sand.u32 %s118, 1
        %s864 = scalar_lea.sflag [#allocation4], %s863
        %s865 = sand.u32 %s118, 1
        %s866 = smul.addr %s865, 64
        %s867 = scalar_lea.vmem [#allocation5], %s866
        // Predicated region
        $region41: #{tpu_custom_call.1} parent=35 // pred_check
          %p868 = pneg %p128
        $region42: #{tpu_custom_call.1} parent=35 // pred_check_branch
          %870 = sbr.rel (%p868) target = $region44
        $region43: #{tpu_custom_call.1} parent=35 // pred_region
          %s871 = smul.u32 16, %s21
          %873 = vsyncadd %s864, 0
          %s874 = smul.addr %s871, 4
          %s875 = scalar_lea.hbm %s4, %s874
          %s876 = sshll.u32 %s867, 4
          %s877 = int_to_ptr.vmem [resolvable:$true] %s876
          %s878 = sshll.u32 %s875, 4
          %s879 = int_to_ptr.hbm [resolvable:$true] %s878
          %884 = dma.vmem_to_hbm [thread:$0]  %s877, 1024, %s879, %s864, 64, 64, 4
        $region44: #{tpu_custom_call.1} parent=35 // pred_fallthru
          _
      $region36: #{tpu_custom_call.1} parent=5 // pred_fallthru
        _
      %p885 = scmp.le.s32.totalorder 2, %s16
      // Predicated region
      $region45: #{tpu_custom_call.1} parent=5 // pred_check
        %p886 = pneg %p885
      $region46: #{tpu_custom_call.1} parent=5 // pred_check_branch
        %888 = sbr.rel (%p886) target = $region48
      $region47: #{tpu_custom_call.1} parent=5 // pred_region
        %s889 = ssub.s32 %s16, 2
        // Predicated region
        $region49: #{tpu_custom_call.1} parent=47 // pred_check
          %p890 = pneg %p134
        $region50: #{tpu_custom_call.1} parent=47 // pred_check_branch
          %892 = sbr.rel (%p890) target = $region52
        $region51: #{tpu_custom_call.1} parent=47 // pred_region
          %s893 = sand.u32 %s119, 1
          %s894 = scalar_lea.sflag [#allocation4], %s893
          %s895 = sand.u32 %s119, 1
          %s896 = smul.addr %s895, 64
          %s897 = scalar_lea.vmem [#allocation5], %s896
          %899 = dma.done %s894, 1024
        $region52: #{tpu_custom_call.1} parent=47 // pred_fallthru
          _
      $region48: #{tpu_custom_call.1} parent=5 // pred_fallthru
        _
    $region6: #{tpu_custom_call.1} parent=1 // loop_footer
      %s20 = sadd.s32 1, %s16
    $region7: #{tpu_custom_call.1} parent=1 // loop_footer_branch
      %15 = sbr.rel target = $region3
    $region8: #{tpu_custom_call.1} parent=1 // loop_exit
      _
    %900 = vsyncpa [#allocation3], 1
    %s901 = scalar_lea.sflag [#allocation3], 1
    %902 = vsyncpa %s901, 1
    %903 = vsyncpa [#allocation4], 1
    %s904 = scalar_lea.sflag [#allocation4], 1
    %905 = vsyncpa %s904, 1

</llo_original>
